<compile_context>
chip_gen: v6e
topology: v6e:2x2x1
jax: 0.10.0
libtpu: 0.0.40
codegen_flags: <defaults>
</compile_context>

<pallas_src>
import numpy as np
import jax
import jax.numpy as jnp
from jax.experimental import pallas as pl
from jax.experimental.pallas import tpu as pltpu

# ---- model sizes (small, consistent with the module's structure) ----
B = 2                     # batch
C = 4                     # input channels
H = W = 16                # spatial
N0, N1, N2 = 64, 32, 16   # model_3layer(N0, N1, N2, ndim) hidden sizes (scaled down)
NDIM = 3                  # ndim
NUM_CLASSES = 8           # len(classes)

HALL1 = NUM_CLASSES * N1      # 256  (all-class layer-1 width)
HALL2 = NUM_CLASSES * N2      # 128  (all-class layer-2 width)
OALL = NUM_CLASSES * NDIM     # 24   (all-class output width)
OUT_PAD = 128                 # lane-dense output slab; first NDIM lanes are valid

NUM_INPUTS = 12

# advisory cost estimate (static sizes)
_FLOPS = 2 * B * (C * N0 + N0 * HALL1 + HALL1 * HALL2 + HALL2 * OALL + OALL * OUT_PAD)
_TRANS = B * OUT_PAD
_BYTES = 4 * (B * 1 + B * C + C * N0 + N0 + N0 * HALL1 + HALL1 + HALL1 * HALL2 + HALL2
              + HALL2 * OALL + OALL + OALL + OALL * OUT_PAD + B * OUT_PAD)


# ----------------------------- Pallas kernel --------------------------------

def fused_regression_kernel(labels_ref,                 # (B, 1) int32
                            pooled_ref,                 # (B, C) f32   (GAP'ed image)
                            wf_ref, bf_ref,             # (C, N0), (1, N0)
                            w1_ref, b1_ref,             # (N0, C*N1), (1, C*N1)   all heads, layer 1
                            w2_ref, b2_ref,             # (C*N1, C*N2), (1, C*N2) block-diagonal layer 2
                            w3_ref, b3_ref,             # (C*N2, C*NDIM), (1, C*NDIM) block-diag layer 3
                            cls_ids_ref,                # (1, C*NDIM) int32: class id of each output lane
                            sel_ref,                    # (C*NDIM, OUT_PAD) f32: scatter NDIM cols per class
                            out_ref):                   # (B, OUT_PAD) f32
    """Single invocation: whole batch, all class heads, in-kernel label select."""
    # stand-in backbone tail: Linear(C, N0) + ReLU on the pre-pooled features
    feat = jnp.maximum(
        jnp.dot(pooled_ref[...], wf_ref[...], preferred_element_type=jnp.float32) + bf_ref[...],
        0.0)                                                            # (B, N0)

    # all C heads for all samples (block-diagonal layers keep classes independent)
    h1 = jnp.maximum(
        jnp.dot(feat, w1_ref[...], preferred_element_type=jnp.float32) + b1_ref[...], 0.0)   # (B, C*N1)
    h2 = jnp.maximum(
        jnp.dot(h1, w2_ref[...], preferred_element_type=jnp.float32) + b2_ref[...], 0.0)     # (B, C*N2)
    o_all = jnp.dot(h2, w3_ref[...], preferred_element_type=jnp.float32) + b3_ref[...]        # (B, C*NDIM)

    # per-sample head selection == the reference's one_hot + bmm:
    #   mask[b, c*NDIM + n] = (c == label[b]); OOB labels -> all-zero mask -> y = 0
    mask = (cls_ids_ref[...] == labels_ref[...]).astype(jnp.float32)    # (B, C*NDIM)
    y = jnp.dot(o_all * mask, sel_ref[...], preferred_element_type=jnp.float32)   # (B, OUT_PAD)

    out_ref[...] = (jnp.pi * jnp.tanh(y)).astype(out_ref.dtype)


# ------------------------------ wrapper --------------------------------------

def _block_diag(w):
    """(C, K, N) -> (C*K, C*N) with w[c] on the c-th diagonal block."""
    ccls, k, n = w.shape
    eye = jnp.eye(ccls, dtype=w.dtype)
    return jnp.einsum('ckn,cd->ckdn', w, eye).reshape(ccls * k, ccls * n)


def regression_model_forward(x, label, params):
    """x: (B, C, H, W) f32 NCHW image batch; label: (B, 1) int32 class indices."""
    labels = label.reshape(B, 1).astype(jnp.int32)
    # global average pool done by XLA (stand-in backbone stem); kernel input shrinks 8 KB -> 32 B
    pooled = jnp.mean(x.reshape(B, C, H * W), axis=-1)                   # (B, C)

    # pack per-class head weights into lane-dense / block-diagonal slabs
    w1f = params["w1"].transpose(1, 0, 2).reshape(N0, HALL1)             # (N0, C*N1)
    b1f = params["b1"].reshape(1, HALL1)
    w2bd = _block_diag(params["w2"])                                     # (C*N1, C*N2)
    b2f = params["b2"].reshape(1, HALL2)
    w3bd = _block_diag(params["w3"])                                     # (C*N2, C*NDIM)
    b3f = params["b3"].reshape(1, OALL)

    # constant helper matrices for the in-kernel label select (built host-side, tiny)
    cls_ids = jnp.asarray(np.repeat(np.arange(NUM_CLASSES), NDIM), jnp.int32).reshape(1, OALL)
    sel = jnp.asarray((np.arange(OALL)[:, None] % NDIM) == np.arange(OUT_PAD)[None, :],
                      jnp.float32)                                       # (C*NDIM, OUT_PAD)

    vmem = pltpu.MemorySpace.VMEM
    out_pad = pl.pallas_call(
        fused_regression_kernel,
        out_shape=jax.ShapeDtypeStruct((B, OUT_PAD), jnp.float32),
        in_specs=[pl.BlockSpec(memory_space=vmem) for _ in range(NUM_INPUTS)],
        out_specs=pl.BlockSpec(memory_space=vmem),
        cost_estimate=pl.CostEstimate(flops=_FLOPS, transcendentals=_TRANS,
                                      bytes_accessed=_BYTES),
    )(labels, pooled, params["wf"], params["bf"],
      w1f, b1f, w2bd, b2f, w3bd, b3f, cls_ids, sel)

    return out_pad[:, :NDIM]                                             # (B, NDIM)


# --------------------------- pure-JAX reference ------------------------------

def reference_forward(x, label, params):
    pooled = jnp.mean(x.reshape(B, C, H * W), axis=-1)
    feat = jnp.maximum(pooled @ params["wf"] + params["bf"], 0.0)
    outs = []
    for i in range(NUM_CLASSES):
        h1 = jnp.maximum(feat @ params["w1"][i] + params["b1"][i], 0.0)
        h2 = jnp.maximum(h1 @ params["w2"][i] + params["b2"][i], 0.0)
        outs.append(h2 @ params["w3"][i] + params["b3"][i])
    stacked = jnp.stack(outs).transpose(1, 2, 0)                         # (B, NDIM, NUM_CLASSES)
    onehot = jax.nn.one_hot(label[:, 0], NUM_CLASSES, dtype=jnp.float32)[:, :, None]
    y = jnp.squeeze(jnp.matmul(stacked, onehot), 2)
    return jnp.pi * jnp.tanh(y)


# --------------------------------- main --------------------------------------

def make_params(key):
    ks = jax.random.split(key, 8)
    s = 0.1
    return {
        "wf": s * jax.random.normal(ks[0], (C, N0), jnp.float32),
        "bf": s * jax.random.normal(ks[1], (1, N0), jnp.float32),
        "w1": s * jax.random.normal(ks[2], (NUM_CLASSES, N0, N1), jnp.float32),
        "b1": s * jax.random.normal(ks[3], (NUM_CLASSES, 1, N1), jnp.float32),
        "w2": s * jax.random.normal(ks[4], (NUM_CLASSES, N1, N2), jnp.float32),
        "b2": s * jax.random.normal(ks[5], (NUM_CLASSES, 1, N2), jnp.float32),
        "w3": s * jax.random.normal(ks[6], (NUM_CLASSES, N2, NDIM), jnp.float32),
        "b3": s * jax.random.normal(ks[7], (NUM_CLASSES, 1, NDIM), jnp.float32),
    }


if __name__ == "__main__":
    key = jax.random.PRNGKey(0)
    kx, kl, kp = jax.random.split(key, 3)

    x = jax.random.normal(kx, (B, C, H, W), jnp.float32)                 # NCHW, like PyTorch
    label = jax.random.randint(kl, (B, 1), 0, NUM_CLASSES, jnp.int32)
    params = make_params(kp)

    y = regression_model_forward(x, label, params)
    y = jax.block_until_ready(y)

    y_ref = reference_forward(x, label, params)
    np.testing.assert_allclose(np.asarray(y), np.asarray(y_ref), rtol=1e-5, atol=1e-5)

    assert y.shape == (B, NDIM) and y.dtype == jnp.float32
    print("KERNEL_OK")
</pallas_src>

<mosaic_0001>
module attributes {stable_mosaic.version = 11 : i64} {
  func.func @fused_regression_kernel(%arg0: memref<2x1xi32, #tpu.memory_space<vmem>>, %arg1: memref<2x4xf32, #tpu.memory_space<vmem>>, %arg2: memref<4x64xf32, #tpu.memory_space<vmem>>, %arg3: memref<1x64xf32, #tpu.memory_space<vmem>>, %arg4: memref<64x256xf32, #tpu.memory_space<vmem>>, %arg5: memref<1x256xf32, #tpu.memory_space<vmem>>, %arg6: memref<256x128xf32, #tpu.memory_space<vmem>>, %arg7: memref<1x128xf32, #tpu.memory_space<vmem>>, %arg8: memref<128x24xf32, #tpu.memory_space<vmem>>, %arg9: memref<1x24xf32, #tpu.memory_space<vmem>>, %arg10: memref<1x24xi32, #tpu.memory_space<vmem>>, %arg11: memref<24x128xf32, #tpu.memory_space<vmem>>, %arg12: memref<2x128xf32, #tpu.memory_space<vmem>>) attributes {dimension_semantics = [], scalar_prefetch = 0 : i64, scratch_operands = 0 : i64, tpu.core_type = #tpu.core_type<tc>} {
    %c0 = arith.constant 0 : index
    %c0_0 = arith.constant 0 : index
    %0 = vector.load %arg1[%c0, %c0_0] : memref<2x4xf32, #tpu.memory_space<vmem>>, vector<2x4xf32>
    %c0_1 = arith.constant 0 : index
    %c0_2 = arith.constant 0 : index
    %1 = vector.load %arg2[%c0_1, %c0_2] : memref<4x64xf32, #tpu.memory_space<vmem>>, vector<4x64xf32>
    %cst = arith.constant dense<0.000000e+00> : vector<2x64xf32>
    %2 = tpu.matmul %0, %1, %cst {dimension_numbers = #tpu.dot_dimension_numbers<[1], [0], [0], [1], [0, 0, 1, 1], [], []>} : vector<2x4xf32>, vector<4x64xf32>, vector<2x64xf32> -> vector<2x64xf32>
    %c0_3 = arith.constant 0 : index
    %c0_4 = arith.constant 0 : index
    %3 = vector.load %arg3[%c0_3, %c0_4] : memref<1x64xf32, #tpu.memory_space<vmem>>, vector<1x64xf32>
    %4 = vector.broadcast %3 : vector<1x64xf32> to vector<2x64xf32>
    %5 = arith.addf %2, %4 : vector<2x64xf32>
    %cst_5 = arith.constant 0.000000e+00 : f32
    %6 = vector.broadcast %cst_5 : f32 to vector<2x64xf32>
    %7 = arith.maximumf %5, %6 : vector<2x64xf32>
    %c0_6 = arith.constant 0 : index
    %c0_7 = arith.constant 0 : index
    %8 = vector.load %arg4[%c0_6, %c0_7] : memref<64x256xf32, #tpu.memory_space<vmem>>, vector<64x256xf32>
    %cst_8 = arith.constant dense<0.000000e+00> : vector<2x256xf32>
    %9 = tpu.matmul %7, %8, %cst_8 {dimension_numbers = #tpu.dot_dimension_numbers<[1], [0], [0], [1], [0, 0, 1, 1], [], []>} : vector<2x64xf32>, vector<64x256xf32>, vector<2x256xf32> -> vector<2x256xf32>
    %c0_9 = arith.constant 0 : index
    %c0_10 = arith.constant 0 : index
    %10 = vector.load %arg5[%c0_9, %c0_10] : memref<1x256xf32, #tpu.memory_space<vmem>>, vector<1x256xf32>
    %11 = vector.broadcast %10 : vector<1x256xf32> to vector<2x256xf32>
    %12 = arith.addf %9, %11 : vector<2x256xf32>
    %cst_11 = arith.constant 0.000000e+00 : f32
    %13 = vector.broadcast %cst_11 : f32 to vector<2x256xf32>
    %14 = arith.maximumf %12, %13 : vector<2x256xf32>
    %c0_12 = arith.constant 0 : index
    %c0_13 = arith.constant 0 : index
    %15 = vector.load %arg6[%c0_12, %c0_13] : memref<256x128xf32, #tpu.memory_space<vmem>>, vector<256x128xf32>
    %cst_14 = arith.constant dense<0.000000e+00> : vector<2x128xf32>
    %16 = tpu.matmul %14, %15, %cst_14 {dimension_numbers = #tpu.dot_dimension_numbers<[1], [0], [0], [1], [0, 0, 1, 1], [], []>} : vector<2x256xf32>, vector<256x128xf32>, vector<2x128xf32> -> vector<2x128xf32>
    %c0_15 = arith.constant 0 : index
    %c0_16 = arith.constant 0 : index
    %17 = vector.load %arg7[%c0_15, %c0_16] : memref<1x128xf32, #tpu.memory_space<vmem>>, vector<1x128xf32>
    %18 = vector.broadcast %17 : vector<1x128xf32> to vector<2x128xf32>
    %19 = arith.addf %16, %18 : vector<2x128xf32>
    %cst_17 = arith.constant 0.000000e+00 : f32
    %20 = vector.broadcast %cst_17 : f32 to vector<2x128xf32>
    %21 = arith.maximumf %19, %20 : vector<2x128xf32>
    %c0_18 = arith.constant 0 : index
    %c0_19 = arith.constant 0 : index
    %22 = vector.load %arg8[%c0_18, %c0_19] : memref<128x24xf32, #tpu.memory_space<vmem>>, vector<128x24xf32>
    %cst_20 = arith.constant dense<0.000000e+00> : vector<2x24xf32>
    %23 = tpu.matmul %21, %22, %cst_20 {dimension_numbers = #tpu.dot_dimension_numbers<[1], [0], [0], [1], [0, 0, 1, 1], [], []>} : vector<2x128xf32>, vector<128x24xf32>, vector<2x24xf32> -> vector<2x24xf32>
    %c0_21 = arith.constant 0 : index
    %c0_22 = arith.constant 0 : index
    %24 = vector.load %arg9[%c0_21, %c0_22] : memref<1x24xf32, #tpu.memory_space<vmem>>, vector<1x24xf32>
    %25 = vector.broadcast %24 : vector<1x24xf32> to vector<2x24xf32>
    %26 = arith.addf %23, %25 : vector<2x24xf32>
    %c0_23 = arith.constant 0 : index
    %c0_24 = arith.constant 0 : index
    %27 = vector.load %arg10[%c0_23, %c0_24] : memref<1x24xi32, #tpu.memory_space<vmem>>, vector<1x24xi32>
    %c0_25 = arith.constant 0 : index
    %c0_26 = arith.constant 0 : index
    %28 = vector.load %arg0[%c0_25, %c0_26] : memref<2x1xi32, #tpu.memory_space<vmem>>, vector<2x1xi32>
    %29 = vector.broadcast %27 : vector<1x24xi32> to vector<2x24xi32>
    %30 = vector.broadcast %28 : vector<2x1xi32> to vector<2x24xi32>
    %31 = arith.cmpi eq, %29, %30 : vector<2x24xi32>
    %32 = arith.extui %31 : vector<2x24xi1> to vector<2x24xi32>
    %33 = arith.sitofp %32 : vector<2x24xi32> to vector<2x24xf32>
    %34 = arith.mulf %26, %33 : vector<2x24xf32>
    %c0_27 = arith.constant 0 : index
    %c0_28 = arith.constant 0 : index
    %35 = vector.load %arg11[%c0_27, %c0_28] : memref<24x128xf32, #tpu.memory_space<vmem>>, vector<24x128xf32>
    %cst_29 = arith.constant dense<0.000000e+00> : vector<2x128xf32>
    %36 = tpu.matmul %34, %35, %cst_29 {dimension_numbers = #tpu.dot_dimension_numbers<[1], [0], [0], [1], [0, 0, 1, 1], [], []>} : vector<2x24xf32>, vector<24x128xf32>, vector<2x128xf32> -> vector<2x128xf32>
    %37 = math.tanh %36 : vector<2x128xf32>
    %cst_30 = arith.constant 3.14159274 : f32
    %38 = vector.broadcast %cst_30 : f32 to vector<2x128xf32>
    %39 = arith.mulf %38, %37 : vector<2x128xf32>
    %c0_31 = arith.constant 0 : index
    %c0_32 = arith.constant 0 : index
    %40 = vector.load %arg12[%c0_31, %c0_32] : memref<2x128xf32, #tpu.memory_space<vmem>>, vector<2x128xf32>
    tpu.vector_store %arg12[%c0_31, %c0_32], %39 {strides = array<i32>} : memref<2x128xf32, #tpu.memory_space<vmem>>, vector<2x128xf32>,
    return
  }
}

</mosaic_0001>

<llo_original>
// kernel: tpu_custom_call.1
$region0: #{tpu_custom_call.1}
  #allocation0 [shape = 'u32[]', space=smem, size = 0x4, offset = 0x4, fixed_abs, tag = 'smem constant byte address 0x4 - core index']
  #allocation1 [shape = 'u32[144,128]{1,0:T(1,128)}', space=vmem, size = 0x12000, scoped, tag = 'internal scratch']
  %s0 = inlined_call_operand.vmem [shape: s32[2,1], index: 0, kind: input, shape index: {}]
  %s1 = inlined_call_operand.vmem [shape: f32[2,4], index: 1, kind: input, shape index: {}]
  %s2 = inlined_call_operand.vmem [shape: f32[4,64], index: 2, kind: input, shape index: {}]
  %s3 = inlined_call_operand.vmem [shape: f32[1,64], index: 3, kind: input, shape index: {}]
  %s4 = inlined_call_operand.vmem [shape: f32[64,256], index: 4, kind: input, shape index: {}]
  %s5 = inlined_call_operand.vmem [shape: f32[1,256], index: 5, kind: input, shape index: {}]
  %s6 = inlined_call_operand.hbm [shape: f32[256,128], index: 6, kind: input, shape index: {}]
  %s7 = inlined_call_operand.vmem [shape: f32[1,128], index: 7, kind: input, shape index: {}]
  %s8 = inlined_call_operand.vmem [shape: f32[128,24], index: 8, kind: input, shape index: {}]
  %s9 = inlined_call_operand.vmem [shape: f32[1,24], index: 9, kind: input, shape index: {}]
  %s10 = inlined_call_operand.vmem [shape: s32[1,24], index: 10, kind: input, shape index: {}]
  %s11 = inlined_call_operand.vmem [shape: f32[24,128], index: 11, kind: input, shape index: {}]
  %s12 = inlined_call_operand.hbm [shape: f32[2,128], index: 12, kind: output, shape index: {}]
  %s13 = sld [smem:[#allocation0]]
  $region62: #{tpu_custom_call.1} parent=0
    _
  %s15 = ssub.s32 1, %s13
  %s16 = scalar_select 0, %s15, %s13
  $region1: #{tpu_custom_call.1} parent=0
    #allocation2 [shape = 'u8[131072]{0}', space=vmem, size = 0x20000, scoped, tag = 'input window, operand 6, single buffered']
    #allocation3 [shape = 's32[1]{0}', space=sflag, size = 0x4, scoped, tag = 'scoped memory for tpu_custom_call.1']
    #allocation4 [shape = 's32[1]{0}', space=sflag, size = 0x4, scoped, tag = 'scoped memory for tpu_custom_call.1']
    #allocation5 [shape = 'u8[1024]{0}', space=vmem, size = 0x400, scoped, tag = 'output window, operand 0, single buffered']
    %17 = vsyncpa [#allocation3], 0
    %18 = vsyncpa [#allocation4], 0
    // Predicated region
    $region2: #{tpu_custom_call.1} parent=1 // pred_check
      _
    $region3: #{tpu_custom_call.1} parent=1 // pred_check_branch
      %20 = sbr.rel (0) target = $region5
    $region4: #{tpu_custom_call.1} parent=1 // pred_region
      _
    $region5: #{tpu_custom_call.1} parent=1 // pred_fallthru
      _
    // Predicated region
    $region6: #{tpu_custom_call.1} parent=1 // pred_check
      _
    $region7: #{tpu_custom_call.1} parent=1 // pred_check_branch
      %22 = sbr.rel (0) target = $region9
    $region8: #{tpu_custom_call.1} parent=1 // pred_region
      _
    $region9: #{tpu_custom_call.1} parent=1 // pred_fallthru
      _
    // Predicated region
    $region10: #{tpu_custom_call.1} parent=1 // pred_check
      _
    $region11: #{tpu_custom_call.1} parent=1 // pred_check_branch
      %24 = sbr.rel (0) target = $region13
    $region12: #{tpu_custom_call.1} parent=1 // pred_region
      _
    $region13: #{tpu_custom_call.1} parent=1 // pred_fallthru
      _
    // Predicated region
    $region14: #{tpu_custom_call.1} parent=1 // pred_check
      _
    $region15: #{tpu_custom_call.1} parent=1 // pred_check_branch
      %26 = sbr.rel (0) target = $region17
    $region16: #{tpu_custom_call.1} parent=1 // pred_region
      _
    $region17: #{tpu_custom_call.1} parent=1 // pred_fallthru
      _
    // Predicated region
    $region18: #{tpu_custom_call.1} parent=1 // pred_check
      _
    $region19: #{tpu_custom_call.1} parent=1 // pred_check_branch
      %28 = sbr.rel (0) target = $region21
    $region20: #{tpu_custom_call.1} parent=1 // pred_region
      _
    $region21: #{tpu_custom_call.1} parent=1 // pred_fallthru
      _
    // Predicated region
    $region22: #{tpu_custom_call.1} parent=1 // pred_check
      _
    $region23: #{tpu_custom_call.1} parent=1 // pred_check_branch
      %30 = sbr.rel (0) target = $region25
    $region24: #{tpu_custom_call.1} parent=1 // pred_region
      _
    $region25: #{tpu_custom_call.1} parent=1 // pred_fallthru
      _
    // Predicated region
    $region26: #{tpu_custom_call.1} parent=1 // pred_check
      _
    $region27: #{tpu_custom_call.1} parent=1 // pred_check_branch
      %32 = sbr.rel (0) target = $region29
    $region28: #{tpu_custom_call.1} parent=1 // pred_region
      %s34 = ssub.s32 4096, 4096
      %35 = vsyncadd [#allocation3], %s34
      %s36 = sshll.u32 [#allocation2], 4
      %s37 = int_to_ptr.vmem [resolvable:$true] %s36
      %42 = dma.hbm_to_vmem [thread:$0]  %s6, 4096, %s37, [#allocation3], 128, 128, 8
    $region29: #{tpu_custom_call.1} parent=1 // pred_fallthru
      _
    // Predicated region
    $region30: #{tpu_custom_call.1} parent=1 // pred_check
      _
    $region31: #{tpu_custom_call.1} parent=1 // pred_check_branch
      %44 = sbr.rel (0) target = $region33
    $region32: #{tpu_custom_call.1} parent=1 // pred_region
      _
    $region33: #{tpu_custom_call.1} parent=1 // pred_fallthru
      _
    // Predicated region
    $region34: #{tpu_custom_call.1} parent=1 // pred_check
      _
    $region35: #{tpu_custom_call.1} parent=1 // pred_check_branch
      %46 = sbr.rel (0) target = $region37
    $region36: #{tpu_custom_call.1} parent=1 // pred_region
      _
    $region37: #{tpu_custom_call.1} parent=1 // pred_fallthru
      _
    // Predicated region
    $region38: #{tpu_custom_call.1} parent=1 // pred_check
      _
    $region39: #{tpu_custom_call.1} parent=1 // pred_check_branch
      %48 = sbr.rel (0) target = $region41
    $region40: #{tpu_custom_call.1} parent=1 // pred_region
      _
    $region41: #{tpu_custom_call.1} parent=1 // pred_fallthru
      _
    // Predicated region
    $region42: #{tpu_custom_call.1} parent=1 // pred_check
      _
    $region43: #{tpu_custom_call.1} parent=1 // pred_check_branch
      %50 = sbr.rel (0) target = $region45
    $region44: #{tpu_custom_call.1} parent=1 // pred_region
      _
    $region45: #{tpu_custom_call.1} parent=1 // pred_fallthru
      _
    // Predicated region
    $region46: #{tpu_custom_call.1} parent=1 // pred_check
      _
    $region47: #{tpu_custom_call.1} parent=1 // pred_check_branch
      %52 = sbr.rel (0) target = $region49
    $region48: #{tpu_custom_call.1} parent=1 // pred_region
      _
    $region49: #{tpu_custom_call.1} parent=1 // pred_fallthru
      _
    // Predicated region
    $region50: #{tpu_custom_call.1} parent=1 // pred_check
      _
    $region51: #{tpu_custom_call.1} parent=1 // pred_check_branch
      %54 = sbr.rel (0) target = $region53
    $region52: #{tpu_custom_call.1} parent=1 // pred_region
      %55 = dma.done [#allocation3], 4096
    $region53: #{tpu_custom_call.1} parent=1 // pred_fallthru
      _
    %v56 = vld [vmem:[%s1] sm:$0x3]
    %v57 = vld [vmem:[%s2] sm:$0xf]
    %v58 = vld [vmem:[%s3] sm:$0x1]
    %v60 = vlaneseq
    %v61 = vshrl.u32 %v60, 7
    %v62 = vsub.s32 0, %v61
    %v63 = vrot.slane %v58, %v62
    %vm65 = vcmask 31744
    %v67 = vsel %vm65, %v56, 0
    %vm69 = vcmask 1043456
    %v71 = vsel %vm69, %v57, 0
    %73 = vmatprep.subr.mxu0 0.0
    %74 = vmatpush1.msra.mxu0 0.0
    %75 = vmatprep.subr.mxu0 0.0
    %76 = vmatpush1.msra.mxu0 0.0
    %77 = vmatprep.subr.mxu0 0.0
    %78 = vmatpush1.msra.mxu0 0.0
    %79 = vmatprep.subr.mxu0 0.0
    %80 = vmatpush1.msra.mxu0 0.0
    %81 = vmatprep.subr.mxu0 0.0
    %82 = vmatpush1.msra.mxu0 0.0
    %83 = vmatprep.subr.mxu0 0.0
    %84 = vmatpush1.msra.mxu0 0.0
    %85 = vmatprep.subr.mxu0 0.0
    %86 = vmatpush1.msra.mxu0 0.0
    %87 = vmatprep.subr.mxu0 0.0
    %88 = vmatpush1.msra.mxu0 0.0
    %89 = vmatprep.subr.mxu0 0.0
    %90 = vmatpush1.msra.mxu0 0.0
    %91 = vmatprep.subr.mxu0 0.0
    %92 = vmatpush1.msra.mxu0 0.0
    %93 = vmatprep.subr.mxu0 0.0
    %94 = vmatpush1.msra.mxu0 0.0
    %95 = vmatprep.subr.mxu0 0.0
    %96 = vmatpush1.msra.mxu0 0.0
    %97 = vmatprep.subr.mxu0 0.0
    %98 = vmatpush1.msra.mxu0 0.0
    %99 = vmatprep.subr.mxu0 0.0
    %100 = vmatpush1.msra.mxu0 0.0
    %101 = vmatprep.subr.mxu0 0.0
    %102 = vmatpush1.msra.mxu0 0.0
    %103 = vmatprep.subr.mxu0 0.0
    %104 = vmatpush1.msra.mxu0 %v71
    %105 = vmatprep.subr.mxu0 0.0
    %106 = vmatpush2.msra.mxu0 0.0
    %107 = vmatprep.subr.mxu0 0.0
    %108 = vmatpush2.msra.mxu0 0.0
    %109 = vmatprep.subr.mxu0 0.0
    %110 = vmatpush2.msra.mxu0 0.0
    %111 = vmatprep.subr.mxu0 0.0
    %112 = vmatpush2.msra.mxu0 0.0
    %113 = vmatprep.subr.mxu0 0.0
    %114 = vmatpush2.msra.mxu0 0.0
    %115 = vmatprep.subr.mxu0 0.0
    %116 = vmatpush2.msra.mxu0 0.0
    %117 = vmatprep.subr.mxu0 0.0
    %118 = vmatpush2.msra.mxu0 0.0
    %119 = vmatprep.subr.mxu0 0.0
    %120 = vmatpush2.msra.mxu0 0.0
    %121 = vmatprep.subr.mxu0 0.0
    %122 = vmatpush2.msra.mxu0 0.0
    %123 = vmatprep.subr.mxu0 0.0
    %124 = vmatpush2.msra.mxu0 0.0
    %125 = vmatprep.subr.mxu0 0.0
    %126 = vmatpush2.msra.mxu0 0.0
    %127 = vmatprep.subr.mxu0 0.0
    %128 = vmatpush2.msra.mxu0 0.0
    %129 = vmatprep.subr.mxu0 0.0
    %130 = vmatpush2.msra.mxu0 0.0
    %131 = vmatprep.subr.mxu0 0.0
    %132 = vmatpush2.msra.mxu0 0.0
    %133 = vmatprep.subr.mxu0 0.0
    %134 = vmatpush2.msra.mxu0 0.0
    %135 = vmatprep.subr.mxu0 0.0
    %136 = vmatpush2.msra.mxu0 0.0
    %137 = vmatprep.mubr.f32.mxu0 0.0
    %138 = vmatmul.mubr.f32.gmra.mxu0 %v67
    %v139 = vpop.f32.mrf.mxu0
    %v140 = vadd.f32 %v63, %v139
    %v141 = vpop.f32.mrf.mxu0
    %142 = vdwg.mxu0
    %v143 = vmax.f32 %v140, 0.0
    %v144 = vld [vmem:[%s4] sm:$0xff]
    %v145 = vld [vmem:[%s4 + $0x8] sm:$0xff]
    %v146 = vld [vmem:[%s4 + $0x10] sm:$0xff]
    %v147 = vld [vmem:[%s4 + $0x18] sm:$0xff]
    %v148 = vld [vmem:[%s4 + $0x20] sm:$0xff]
    %v149 = vld [vmem:[%s4 + $0x28] sm:$0xff]
    %v150 = vld [vmem:[%s4 + $0x30] sm:$0xff]
    %v151 = vld [vmem:[%s4 + $0x38] sm:$0xff]
    %v152 = vld [vmem:[%s4 + $0x40] sm:$0xff]
    %v153 = vld [vmem:[%s4 + $0x48] sm:$0xff]
    %v154 = vld [vmem:[%s4 + $0x50] sm:$0xff]
    %v155 = vld [vmem:[%s4 + $0x58] sm:$0xff]
    %v156 = vld [vmem:[%s4 + $0x60] sm:$0xff]
    %v157 = vld [vmem:[%s4 + $0x68] sm:$0xff]
    %v158 = vld [vmem:[%s4 + $0x70] sm:$0xff]
    %v159 = vld [vmem:[%s4 + $0x78] sm:$0xff]
    %v160 = vld [vmem:[%s5] sm:$0x3]
    %v162 = vlaneseq
    %v163 = vshrl.u32 %v162, 7
    %v164 = vsub.s32 0, %v163
    %v165 = vrot.slane %v160, %v164
    %v166 = vlaneseq
    %v167 = vshrl.u32 %v166, 7
    %v168 = vsub.s32 1, %v167
    %v169 = vrot.slane %v160, %v168
    %vm172 = vcmask 523264
    %v174 = vsel %vm172, %v143, 0
    %176 = vmatprep.subr.mxu0 0.0
    %177 = vmatpush1.msra.mxu0 0.0
    %178 = vmatprep.subr.mxu0 0.0
    %179 = vmatpush1.msra.mxu0 0.0
    %180 = vmatprep.subr.mxu0 0.0
    %181 = vmatpush1.msra.mxu0 0.0
    %182 = vmatprep.subr.mxu0 0.0
    %183 = vmatpush1.msra.mxu0 0.0
    %184 = vmatprep.subr.mxu0 0.0
    %185 = vmatpush1.msra.mxu0 0.0
    %186 = vmatprep.subr.mxu0 0.0
    %187 = vmatpush1.msra.mxu0 0.0
    %188 = vmatprep.subr.mxu0 0.0
    %189 = vmatpush1.msra.mxu0 0.0
    %190 = vmatprep.subr.mxu0 0.0
    %191 = vmatpush1.msra.mxu0 0.0
    %192 = vmatprep.subr.mxu0 %v159
    %193 = vmatpush1.msra.mxu0 %v158
    %194 = vmatprep.subr.mxu0 %v157
    %195 = vmatpush1.msra.mxu0 %v156
    %196 = vmatprep.subr.mxu0 %v155
    %197 = vmatpush1.msra.mxu0 %v154
    %198 = vmatprep.subr.mxu0 %v153
    %199 = vmatpush1.msra.mxu0 %v152
    %200 = vmatprep.subr.mxu0 %v151
    %201 = vmatpush1.msra.mxu0 %v150
    %202 = vmatprep.subr.mxu0 %v149
    %203 = vmatpush1.msra.mxu0 %v148
    %204 = vmatprep.subr.mxu0 %v147
    %205 = vmatpush1.msra.mxu0 %v146
    %206 = vmatprep.subr.mxu0 %v145
    %207 = vmatpush1.msra.mxu0 %v144
    %208 = vmatprep.subr.mxu0 0.0
    %209 = vmatpush2.msra.mxu0 0.0
    %210 = vmatprep.subr.mxu0 0.0
    %211 = vmatpush2.msra.mxu0 0.0
    %212 = vmatprep.subr.mxu0 0.0
    %213 = vmatpush2.msra.mxu0 0.0
    %214 = vmatprep.subr.mxu0 0.0
    %215 = vmatpush2.msra.mxu0 0.0
    %216 = vmatprep.subr.mxu0 0.0
    %217 = vmatpush2.msra.mxu0 0.0
    %218 = vmatprep.subr.mxu0 0.0
    %219 = vmatpush2.msra.mxu0 0.0
    %220 = vmatprep.subr.mxu0 0.0
    %221 = vmatpush2.msra.mxu0 0.0
    %222 = vmatprep.subr.mxu0 0.0
    %223 = vmatpush2.msra.mxu0 0.0
    %224 = vmatprep.subr.mxu0 0.0
    %225 = vmatpush2.msra.mxu0 0.0
    %226 = vmatprep.subr.mxu0 0.0
    %227 = vmatpush2.msra.mxu0 0.0
    %228 = vmatprep.subr.mxu0 0.0
    %229 = vmatpush2.msra.mxu0 0.0
    %230 = vmatprep.subr.mxu0 0.0
    %231 = vmatpush2.msra.mxu0 0.0
    %232 = vmatprep.subr.mxu0 0.0
    %233 = vmatpush2.msra.mxu0 0.0
    %234 = vmatprep.subr.mxu0 0.0
    %235 = vmatpush2.msra.mxu0 0.0
    %236 = vmatprep.subr.mxu0 0.0
    %237 = vmatpush2.msra.mxu0 0.0
    %238 = vmatprep.subr.mxu0 0.0
    %239 = vmatpush2.msra.mxu0 0.0
    %240 = vmatprep.mubr.f32.mxu0 0.0
    %241 = vmatmul.mubr.f32.gmra.mxu0 %v174
    %v242 = vpop.f32.mrf.mxu0
    %v243 = vadd.f32 %v165, %v242
    %v244 = vpop.f32.mrf.mxu0
    %v245 = vadd.f32 %v169, %v244
    %246 = vdwg.mxu0
    %v247 = vmax.f32 %v243, 0.0
    %v248 = vmax.f32 %v245, 0.0
    %v249 = vld [vmem:[#allocation2] sm:$0xff]
    %v250 = vld [vmem:[#allocation2 + $0x8] sm:$0xff]
    %v251 = vld [vmem:[#allocation2 + $0x10] sm:$0xff]
    %v252 = vld [vmem:[#allocation2 + $0x18] sm:$0xff]
    %v253 = vld [vmem:[#allocation2 + $0x20] sm:$0xff]
    %v254 = vld [vmem:[#allocation2 + $0x28] sm:$0xff]
    %v255 = vld [vmem:[#allocation2 + $0x30] sm:$0xff]
    %v256 = vld [vmem:[#allocation2 + $0x38] sm:$0xff]
    %v257 = vld [vmem:[#allocation2 + $0x40] sm:$0xff]
    %v258 = vld [vmem:[#allocation2 + $0x48] sm:$0xff]
    %v259 = vld [vmem:[#allocation2 + $0x50] sm:$0xff]
    %v260 = vld [vmem:[#allocation2 + $0x58] sm:$0xff]
    %v261 = vld [vmem:[#allocation2 + $0x60] sm:$0xff]
    %v262 = vld [vmem:[#allocation2 + $0x68] sm:$0xff]
    %v263 = vld [vmem:[#allocation2 + $0x70] sm:$0xff]
    %v264 = vld [vmem:[#allocation2 + $0x78] sm:$0xff]
    %v265 = vld [vmem:[#allocation2 + $0x80] sm:$0xff]
    %v266 = vld [vmem:[#allocation2 + $0x88] sm:$0xff]
    %v267 = vld [vmem:[#allocation2 + $0x90] sm:$0xff]
    %v268 = vld [vmem:[#allocation2 + $0x98] sm:$0xff]
    %v269 = vld [vmem:[#allocation2 + $0xa0] sm:$0xff]
    %v270 = vld [vmem:[#allocation2 + $0xa8] sm:$0xff]
    %v271 = vld [vmem:[#allocation2 + $0xb0] sm:$0xff]
    %v272 = vld [vmem:[#allocation2 + $0xb8] sm:$0xff]
    %v273 = vld [vmem:[#allocation2 + $0xc0] sm:$0xff]
    %v274 = vld [vmem:[#allocation2 + $0xc8] sm:$0xff]
    %v275 = vld [vmem:[#allocation2 + $0xd0] sm:$0xff]
    %v276 = vld [vmem:[#allocation2 + $0xd8] sm:$0xff]
    %v277 = vld [vmem:[#allocation2 + $0xe0] sm:$0xff]
    %v278 = vld [vmem:[#allocation2 + $0xe8] sm:$0xff]
    %v279 = vld [vmem:[#allocation2 + $0xf0] sm:$0xff]
    %v280 = vld [vmem:[#allocation2 + $0xf8] sm:$0xff]
    %v281 = vld [vmem:[%s7] sm:$0x1]
    %v283 = vlaneseq
    %v284 = vshrl.u32 %v283, 7
    %v285 = vsub.s32 0, %v284
    %v286 = vrot.slane %v281, %v285
    %288 = vmatprep.subr.mxu0 0.0
    %289 = vmatpush1.msra.mxu0 %v264
    %290 = vmatprep.subr.mxu0 0.0
    %291 = vmatpush1.msra.mxu0 %v263
    %292 = vmatprep.subr.mxu0 0.0
    %293 = vmatpush1.msra.mxu0 %v262
    %294 = vmatprep.subr.mxu0 0.0
    %295 = vmatpush1.msra.mxu0 %v261
    %296 = vmatprep.subr.mxu0 0.0
    %297 = vmatpush1.msra.mxu0 %v260
    %298 = vmatprep.subr.mxu0 0.0
    %299 = vmatpush1.msra.mxu0 %v259
    %300 = vmatprep.subr.mxu0 0.0
    %301 = vmatpush1.msra.mxu0 %v258
    %302 = vmatprep.subr.mxu0 0.0
    %303 = vmatpush1.msra.mxu0 %v257
    %304 = vmatprep.subr.mxu0 0.0
    %305 = vmatpush1.msra.mxu0 %v256
    %306 = vmatprep.subr.mxu0 0.0
    %307 = vmatpush1.msra.mxu0 %v255
    %308 = vmatprep.subr.mxu0 0.0
    %309 = vmatpush1.msra.mxu0 %v254
    %310 = vmatprep.subr.mxu0 0.0
    %311 = vmatpush1.msra.mxu0 %v253
    %312 = vmatprep.subr.mxu0 0.0
    %313 = vmatpush1.msra.mxu0 %v252
    %314 = vmatprep.subr.mxu0 0.0
    %315 = vmatpush1.msra.mxu0 %v251
    %316 = vmatprep.subr.mxu0 0.0
    %317 = vmatpush1.msra.mxu0 %v250
    %318 = vmatprep.subr.mxu0 0.0
    %319 = vmatpush1.msra.mxu0 %v249
    %320 = vmatprep.subr.mxu0 0.0
    %321 = vmatpush2.msra.mxu0 %v280
    %322 = vmatprep.subr.mxu0 0.0
    %323 = vmatpush2.msra.mxu0 %v279
    %324 = vmatprep.subr.mxu0 0.0
    %325 = vmatpush2.msra.mxu0 %v278
    %326 = vmatprep.subr.mxu0 0.0
    %327 = vmatpush2.msra.mxu0 %v277
    %328 = vmatprep.subr.mxu0 0.0
    %329 = vmatpush2.msra.mxu0 %v276
    %330 = vmatprep.subr.mxu0 0.0
    %331 = vmatpush2.msra.mxu0 %v275
    %332 = vmatprep.subr.mxu0 0.0
    %333 = vmatpush2.msra.mxu0 %v274
    %334 = vmatprep.subr.mxu0 0.0
    %335 = vmatpush2.msra.mxu0 %v273
    %336 = vmatprep.subr.mxu0 0.0
    %337 = vmatpush2.msra.mxu0 %v272
    %338 = vmatprep.subr.mxu0 0.0
    %339 = vmatpush2.msra.mxu0 %v271
    %340 = vmatprep.subr.mxu0 0.0
    %341 = vmatpush2.msra.mxu0 %v270
    %342 = vmatprep.subr.mxu0 0.0
    %343 = vmatpush2.msra.mxu0 %v269
    %344 = vmatprep.subr.mxu0 0.0
    %345 = vmatpush2.msra.mxu0 %v268
    %346 = vmatprep.subr.mxu0 0.0
    %347 = vmatpush2.msra.mxu0 %v267
    %348 = vmatprep.subr.mxu0 0.0
    %349 = vmatpush2.msra.mxu0 %v266
    %350 = vmatprep.subr.mxu0 0.0
    %351 = vmatpush2.msra.mxu0 %v265
    %352 = vmatprep.mubr.f32.mxu0 %v248
    %353 = vmatmul.mubr.f32.gmra.mxu0 %v247
    %v354 = vpop.f32.mrf.mxu0
    %v355 = vadd.f32 %v286, %v354
    %v356 = vpop.f32.mrf.mxu0
    %357 = vdwg.mxu0
    %v358 = vmax.f32 %v355, 0.0
    %v359 = vld [vmem:[%s8] sm:$0xff]
    %v360 = vld [vmem:[%s8 + $0x8] sm:$0xff]
    %v361 = vld [vmem:[%s8 + $0x10] sm:$0xff]
    %v362 = vld [vmem:[%s8 + $0x18] sm:$0xff]
    %v363 = vld [vmem:[%s8 + $0x20] sm:$0xff]
    %v364 = vld [vmem:[%s8 + $0x28] sm:$0xff]
    %v365 = vld [vmem:[%s8 + $0x30] sm:$0xff]
    %v366 = vld [vmem:[%s8 + $0x38] sm:$0xff]
    %v367 = vld [vmem:[%s8 + $0x40] sm:$0xff]
    %v368 = vld [vmem:[%s8 + $0x48] sm:$0xff]
    %v369 = vld [vmem:[%s8 + $0x50] sm:$0xff]
    %v370 = vld [vmem:[%s8 + $0x58] sm:$0xff]
    %v371 = vld [vmem:[%s8 + $0x60] sm:$0xff]
    %v372 = vld [vmem:[%s8 + $0x68] sm:$0xff]
    %v373 = vld [vmem:[%s8 + $0x70] sm:$0xff]
    %v374 = vld [vmem:[%s8 + $0x78] sm:$0xff]
    %v375 = vld [vmem:[%s9] sm:$0x1]
    %v377 = vlaneseq
    %v378 = vshrl.u32 %v377, 7
    %v379 = vsub.s32 0, %v378
    %v380 = vrot.slane %v375, %v379
    %382 = vmatprep.subr.mxu0 0.0
    %383 = vmatpush1.msra.mxu0 %v374
    %384 = vmatprep.subr.mxu0 0.0
    %385 = vmatpush1.msra.mxu0 %v373
    %386 = vmatprep.subr.mxu0 0.0
    %387 = vmatpush1.msra.mxu0 %v372
    %388 = vmatprep.subr.mxu0 0.0
    %389 = vmatpush1.msra.mxu0 %v371
    %390 = vmatprep.subr.mxu0 0.0
    %391 = vmatpush1.msra.mxu0 %v370
    %392 = vmatprep.subr.mxu0 0.0
    %393 = vmatpush1.msra.mxu0 %v369
    %394 = vmatprep.subr.mxu0 0.0
    %395 = vmatpush1.msra.mxu0 %v368
    %396 = vmatprep.subr.mxu0 0.0
    %397 = vmatpush1.msra.mxu0 %v367
    %398 = vmatprep.subr.mxu0 0.0
    %399 = vmatpush1.msra.mxu0 %v366
    %400 = vmatprep.subr.mxu0 0.0
    %401 = vmatpush1.msra.mxu0 %v365
    %402 = vmatprep.subr.mxu0 0.0
    %403 = vmatpush1.msra.mxu0 %v364
    %404 = vmatprep.subr.mxu0 0.0
    %405 = vmatpush1.msra.mxu0 %v363
    %406 = vmatprep.subr.mxu0 0.0
    %407 = vmatpush1.msra.mxu0 %v362
    %408 = vmatprep.subr.mxu0 0.0
    %409 = vmatpush1.msra.mxu0 %v361
    %410 = vmatprep.subr.mxu0 0.0
    %411 = vmatpush1.msra.mxu0 %v360
    %412 = vmatprep.subr.mxu0 0.0
    %413 = vmatpush1.msra.mxu0 %v359
    %414 = vmatprep.subr.mxu0 0.0
    %415 = vmatpush2.msra.mxu0 0.0
    %416 = vmatprep.subr.mxu0 0.0
    %417 = vmatpush2.msra.mxu0 0.0
    %418 = vmatprep.subr.mxu0 0.0
    %419 = vmatpush2.msra.mxu0 0.0
    %420 = vmatprep.subr.mxu0 0.0
    %421 = vmatpush2.msra.mxu0 0.0
    %422 = vmatprep.subr.mxu0 0.0
    %423 = vmatpush2.msra.mxu0 0.0
    %424 = vmatprep.subr.mxu0 0.0
    %425 = vmatpush2.msra.mxu0 0.0
    %426 = vmatprep.subr.mxu0 0.0
    %427 = vmatpush2.msra.mxu0 0.0
    %428 = vmatprep.subr.mxu0 0.0
    %429 = vmatpush2.msra.mxu0 0.0
    %430 = vmatprep.subr.mxu0 0.0
    %431 = vmatpush2.msra.mxu0 0.0
    %432 = vmatprep.subr.mxu0 0.0
    %433 = vmatpush2.msra.mxu0 0.0
    %434 = vmatprep.subr.mxu0 0.0
    %435 = vmatpush2.msra.mxu0 0.0
    %436 = vmatprep.subr.mxu0 0.0
    %437 = vmatpush2.msra.mxu0 0.0
    %438 = vmatprep.subr.mxu0 0.0
    %439 = vmatpush2.msra.mxu0 0.0
    %440 = vmatprep.subr.mxu0 0.0
    %441 = vmatpush2.msra.mxu0 0.0
    %442 = vmatprep.subr.mxu0 0.0
    %443 = vmatpush2.msra.mxu0 0.0
    %444 = vmatprep.subr.mxu0 0.0
    %445 = vmatpush2.msra.mxu0 0.0
    %446 = vmatprep.mubr.f32.mxu0 0.0
    %447 = vmatmul.mubr.f32.gmra.mxu0 %v358
    %v448 = vpop.f32.mrf.mxu0
    %v449 = vadd.f32 %v380, %v448
    %v450 = vpop.f32.mrf.mxu0
    %451 = vdwg.mxu0
    %v452 = vld [vmem:[%s10] sm:$0x1]
    %v453 = vld [vmem:[%s0] sm:$0x3]
    %v454 = vlaneseq
    %v455 = vshrl.u32 %v454, 7
    %v456 = vsub.s32 0, %v455
    %v457 = vrot.slane %v452, %v456
    %458 = vset.pattern.permute.xlu0 0
    %459 = vperm.xlu0 %458, %v453
    %v460 = vpop.permute.xlu0 %459
    %vm461 = vcmp.eq.s32.totalorder %v457, %v460
    %v462 = vsel %vm461, 1, 0
    %v463 = vcvt.s32.f32 %v462
    %v464 = vmul.f32 %v449, %v463
    %v465 = vld [vmem:[%s11] sm:$0xff]
    %v466 = vld [vmem:[%s11 + $0x8] sm:$0xff]
    %v467 = vld [vmem:[%s11 + $0x10] sm:$0xff]
    %vm468 = vcmask 195584
    %v470 = vsel %vm468, %v464, 0
    %472 = vmatprep.subr.mxu0 0.0
    %473 = vmatpush1.msra.mxu0 0.0
    %474 = vmatprep.subr.mxu0 0.0
    %475 = vmatpush1.msra.mxu0 0.0
    %476 = vmatprep.subr.mxu0 0.0
    %477 = vmatpush1.msra.mxu0 0.0
    %478 = vmatprep.subr.mxu0 0.0
    %479 = vmatpush1.msra.mxu0 0.0
    %480 = vmatprep.subr.mxu0 0.0
    %481 = vmatpush1.msra.mxu0 0.0
    %482 = vmatprep.subr.mxu0 0.0
    %483 = vmatpush1.msra.mxu0 0.0
    %484 = vmatprep.subr.mxu0 0.0
    %485 = vmatpush1.msra.mxu0 0.0
    %486 = vmatprep.subr.mxu0 0.0
    %487 = vmatpush1.msra.mxu0 0.0
    %488 = vmatprep.subr.mxu0 0.0
    %489 = vmatpush1.msra.mxu0 0.0
    %490 = vmatprep.subr.mxu0 0.0
    %491 = vmatpush1.msra.mxu0 0.0
    %492 = vmatprep.subr.mxu0 0.0
    %493 = vmatpush1.msra.mxu0 0.0
    %494 = vmatprep.subr.mxu0 0.0
    %495 = vmatpush1.msra.mxu0 0.0
    %496 = vmatprep.subr.mxu0 0.0
    %497 = vmatpush1.msra.mxu0 0.0
    %498 = vmatprep.subr.mxu0 0.0
    %499 = vmatpush1.msra.mxu0 %v467
    %500 = vmatprep.subr.mxu0 0.0
    %501 = vmatpush1.msra.mxu0 %v466
    %502 = vmatprep.subr.mxu0 0.0
    %503 = vmatpush1.msra.mxu0 %v465
    %504 = vmatprep.subr.mxu0 0.0
    %505 = vmatpush2.msra.mxu0 0.0
    %506 = vmatprep.subr.mxu0 0.0
    %507 = vmatpush2.msra.mxu0 0.0
    %508 = vmatprep.subr.mxu0 0.0
    %509 = vmatpush2.msra.mxu0 0.0
    %510 = vmatprep.subr.mxu0 0.0
    %511 = vmatpush2.msra.mxu0 0.0
    %512 = vmatprep.subr.mxu0 0.0
    %513 = vmatpush2.msra.mxu0 0.0
    %514 = vmatprep.subr.mxu0 0.0
    %515 = vmatpush2.msra.mxu0 0.0
    %516 = vmatprep.subr.mxu0 0.0
    %517 = vmatpush2.msra.mxu0 0.0
    %518 = vmatprep.subr.mxu0 0.0
    %519 = vmatpush2.msra.mxu0 0.0
    %520 = vmatprep.subr.mxu0 0.0
    %521 = vmatpush2.msra.mxu0 0.0
    %522 = vmatprep.subr.mxu0 0.0
    %523 = vmatpush2.msra.mxu0 0.0
    %524 = vmatprep.subr.mxu0 0.0
    %525 = vmatpush2.msra.mxu0 0.0
    %526 = vmatprep.subr.mxu0 0.0
    %527 = vmatpush2.msra.mxu0 0.0
    %528 = vmatprep.subr.mxu0 0.0
    %529 = vmatpush2.msra.mxu0 0.0
    %530 = vmatprep.subr.mxu0 0.0
    %531 = vmatpush2.msra.mxu0 0.0
    %532 = vmatprep.subr.mxu0 0.0
    %533 = vmatpush2.msra.mxu0 0.0
    %534 = vmatprep.subr.mxu0 0.0
    %535 = vmatpush2.msra.mxu0 0.0
    %536 = vmatprep.mubr.f32.mxu0 0.0
    %537 = vmatmul.mubr.f32.gmra.mxu0 %v470
    %v538 = vpop.f32.mrf.mxu0
    %v539 = vadd.f32 0.0, %v538
    %v540 = vpop.f32.mrf.mxu0
    %541 = vdwg.mxu0
    %v542 = vtanh.pop %v539
    %v543 = vmul.f32 %v542, 3.1415927
    %544 = vst [vmem:[#allocation5] sm:$0x3] %v543
    // Predicated region
    $region54: #{tpu_custom_call.1} parent=1 // pred_check
      _
    $region55: #{tpu_custom_call.1} parent=1 // pred_check_branch
      %546 = sbr.rel (0) target = $region57
    $region56: #{tpu_custom_call.1} parent=1 // pred_region
      %s548 = ssub.s32 32, 32
      %549 = vsyncadd [#allocation4], %s548
      %s551 = sshll.u32 [#allocation5], 4
      %s552 = int_to_ptr.vmem [resolvable:$true] %s551
      %554 = dma.vmem_to_hbm [thread:$0]  %s552, 32, %s12, [#allocation4]
    $region57: #{tpu_custom_call.1} parent=1 // pred_fallthru
      _
    // Predicated region
    $region58: #{tpu_custom_call.1} parent=1 // pred_check
      _
    $region59: #{tpu_custom_call.1} parent=1 // pred_check_branch
      %556 = sbr.rel (0) target = $region61
    $region60: #{tpu_custom_call.1} parent=1 // pred_region
      %557 = dma.done [#allocation4], 32
    $region61: #{tpu_custom_call.1} parent=1 // pred_fallthru
      _
    %558 = vsyncpa [#allocation3], 1
    %559 = vsyncpa [#allocation4], 1

</llo_original>
